<compile_context>
chip_gen: v7x
topology: tpu7x:2x2x1
jax: 0.10.0
libtpu: 0.0.40
codegen_flags: <defaults>
</compile_context>

<pallas_src>
import functools
import math

import jax
import jax.numpy as jnp
from jax.experimental import pallas as pl
from jax.experimental.pallas import tpu as pltpu


def _gelu_tanh(x):
    # TODO(synk): PyTorch nn.GELU() defaults to the exact erf-GELU; the tanh
    # approximation is used for guaranteed Mosaic lowering (max abs dev ~1e-3).
    c = math.sqrt(2.0 / math.pi)
    return 0.5 * x * (1.0 + jnp.tanh(c * (x + 0.044715 * (x * x * x))))


def _round_up(v, m):
    return ((v + m - 1) // m) * m


def _mlp_kernel(x_ref, wgu_ref, wd_ref, o_ref, *acc_refs, ti, n_steps):
    """One (TM tokens, TI intermediate) step of the fused gated MLP.

    grid = (M//TM, I//TI); axis 1 reduces over the intermediate dimension.
    wgu_ref holds [gate_j | up_j] weight columns for this TI block, so the
    stage-1 projection is a single (TM,D)x(D,2*TI) MXU matmul.
    """
    x = x_ref[...].astype(wgu_ref.dtype)                                    # (TM, D)
    xw = jnp.dot(x, wgu_ref[...], preferred_element_type=jnp.float32)       # (TM, 2*TI)
    gate = xw[:, :ti]
    up = xw[:, ti:]
    h = (_gelu_tanh(gate) * up).astype(wd_ref.dtype)                        # (TM, TI)
    partial = jnp.dot(h, wd_ref[...], preferred_element_type=jnp.float32)   # (TM, D)

    if n_steps == 1:
        # Single reduction step: no scratch, no init/finalize, direct store.
        o_ref[...] = partial.astype(o_ref.dtype)
        return

    acc_ref = acc_refs[0]
    j = pl.program_id(1)

    @pl.when(j == 0)
    def _():
        acc_ref[...] = partial                     # init == first partial (no zero pass)

    @pl.when(jnp.logical_and(j > 0, j < n_steps - 1))
    def _():
        acc_ref[...] = acc_ref[...] + partial

    @pl.when(j == n_steps - 1)
    def _():
        # Final step: write output directly (saves a (TM,D) f32 store + reload).
        o_ref[...] = (acc_ref[...] + partial).astype(o_ref.dtype)


def prepare_mlp_params(gate_w, up_w, down_w, *, ti=None, compute_dtype=jnp.bfloat16):
    """One-time weight preparation (layout + dtype). PyTorch nn.Linear layouts in:
    gate_w, up_w: (intermediate, d_model); down_w: (d_model, intermediate)."""
    inter, d = gate_w.shape

    # Pad the intermediate dim to a lane multiple so in-kernel gate/up slices are
    # lane-aligned; zero rows/cols contribute exactly zero to the output.
    inter_pad = _round_up(inter, 128)
    if inter_pad != inter:
        pad = inter_pad - inter
        gate_w = jnp.pad(gate_w, ((0, pad), (0, 0)))
        up_w = jnp.pad(up_w, ((0, pad), (0, 0)))
        down_w = jnp.pad(down_w, ((0, 0), (0, pad)))
        inter = inter_pad

    if ti is None:
        ti = next((c for c in (512, 256, 128) if inter % c == 0), inter)
    assert inter % ti == 0
    nb = inter // ti

    wg_t = gate_w.T.astype(compute_dtype)   # (D, I)
    wu_t = up_w.T.astype(compute_dtype)     # (D, I)
    # Block-interleave gate/up columns so reduction block j is exactly [G_j | U_j]:
    # one BlockSpec, one weight DMA stream, one wide matmul per step.
    wgu = jnp.stack(
        [wg_t.reshape(d, nb, ti), wu_t.reshape(d, nb, ti)], axis=2
    ).reshape(d, 2 * inter)
    wd = down_w.T.astype(compute_dtype)     # (I, D)
    return {"wgu": wgu, "wd": wd, "ti": ti, "d": d, "inter": inter}


def _vmem_capacity_bytes():
    try:
        cap = getattr(pltpu.get_tpu_info(), "vmem_capacity_bytes", None)
        if cap:
            return int(cap)
    except Exception:
        pass
    return 64 * 1024 * 1024  # conservative fallback: v7x per-TensorCore VMEM


def _tile_vmem_bytes(tm, ti, d, x_bytes, w_bytes, out_bytes, multi_step):
    return (2 * tm * d * x_bytes               # x tile (double-buffered)
            + 2 * d * (2 * ti) * w_bytes       # fused [gate|up] weight tile
            + 2 * ti * d * w_bytes             # down weight tile
            + 2 * tm * d * out_bytes           # output tile
            + (tm * d * 4 if multi_step else 0))   # f32 accumulator


def _choose_tm(m, ti, d, x_bytes, w_bytes, out_bytes, multi_step, budget):
    cap = max(8, _round_up(m, 8))
    tm = 8
    for c in (1024, 512, 256, 128, 64, 32, 16, 8):
        if c > cap:
            continue
        if _tile_vmem_bytes(c, ti, d, x_bytes, w_bytes, out_bytes, multi_step) <= budget:
            tm = c
            break
    # v7x megacore: keep >= 2 blocks on the parallel axis whenever possible.
    if _round_up(m, tm) // tm < 2 and tm >= 16:
        tm //= 2
    return tm


def mlp_forward(x, params, *, tm=None):
    """MLP.forward: down_proj(GELU(gate_proj(x)) * up_proj(x)). Dropout: eval identity."""
    wgu, wd = params["wgu"], params["wd"]
    d, inter, ti = params["d"], params["inter"], params["ti"]
    assert x.shape[-1] == d
    lead = x.shape[:-1]

    x2 = x.reshape(-1, d)
    m = x2.shape[0]
    n_steps = inter // ti

    x_bytes = x2.dtype.itemsize
    w_bytes = wgu.dtype.itemsize
    out_bytes = x.dtype.itemsize

    vmem_cap = _vmem_capacity_bytes()
    if tm is None:
        tm = _choose_tm(m, ti, d, x_bytes, w_bytes, out_bytes, n_steps > 1,
                        int(vmem_cap * 0.7))

    m_pad = _round_up(m, tm)
    if m_pad != m:
        x2 = jnp.pad(x2, ((0, m_pad - m), (0, 0)))

    grid = (m_pad // tm, n_steps)
    vmem_limit = max(
        min(int(vmem_cap * 0.8), 100 * 1024 * 1024),
        _tile_vmem_bytes(tm, ti, d, x_bytes, w_bytes, out_bytes, n_steps > 1),
    )

    # Deeper weight buffering only when decode-like shapes force a small TM (v5e).
    w_kwargs = {}
    if tm < 256 and n_steps >= 3:
        w_kwargs["pipeline_mode"] = pl.Buffered(3)

    kernel = functools.partial(_mlp_kernel, ti=ti, n_steps=n_steps)
    scratch = [pltpu.VMEM((tm, d), jnp.float32)] if n_steps > 1 else []

    out = pl.pallas_call(
        kernel,
        out_shape=jax.ShapeDtypeStruct((m_pad, d), x.dtype),
        grid_spec=pltpu.PrefetchScalarGridSpec(
            num_scalar_prefetch=0,
            grid=grid,
            in_specs=[
                pl.BlockSpec((tm, d), lambda i, j: (i, 0)),                   # x: resident over j
                pl.BlockSpec((d, 2 * ti), lambda i, j: (0, j), **w_kwargs),   # [gate|up]_j
                pl.BlockSpec((ti, d), lambda i, j: (j, 0), **w_kwargs),       # down_j
            ],
            out_specs=pl.BlockSpec((tm, d), lambda i, j: (i, 0)),
            scratch_shapes=scratch,
        ),
        compiler_params=pltpu.CompilerParams(
            dimension_semantics=("parallel", "arbitrary"),
            vmem_limit_bytes=vmem_limit,
        ),
    )(x2, wgu, wd)

    if m_pad != m:
        out = out[:m]
    # TODO(synk): nn.Dropout(p=0.1) is identity at inference; training-mode masking
    # would use pltpu.prng_seed / pltpu.prng_random_bits in-kernel.
    return out.reshape(*lead, d)


if __name__ == "__main__":
    batch, seq, d_model, intermediate = 2, 8, 128, 256

    key = jax.random.PRNGKey(0)
    kx, kg, ku, kd = jax.random.split(key, 4)
    x = jax.random.normal(kx, (batch, seq, d_model), jnp.float32)
    gate_w = jax.random.normal(kg, (intermediate, d_model), jnp.float32) / math.sqrt(d_model)
    up_w = jax.random.normal(ku, (intermediate, d_model), jnp.float32) / math.sqrt(d_model)
    down_w = jax.random.normal(kd, (d_model, intermediate), jnp.float32) / math.sqrt(intermediate)

    # Plain-JAX reference of the PyTorch forward (dropout eval mode), computed in f32
    # from the same bf16-rounded operands the kernel consumes.
    hp = jax.lax.Precision.HIGHEST
    xb = x.astype(jnp.bfloat16).astype(jnp.float32)
    gw = gate_w.astype(jnp.bfloat16).astype(jnp.float32)
    uw = up_w.astype(jnp.bfloat16).astype(jnp.float32)
    dw = down_w.astype(jnp.bfloat16).astype(jnp.float32)
    gate_r = jnp.einsum("bsd,id->bsi", xb, gw, precision=hp)
    up_r = jnp.einsum("bsd,id->bsi", xb, uw, precision=hp)
    ref = jnp.einsum("bsi,di->bsd", _gelu_tanh(gate_r) * up_r, dw, precision=hp)

    # Multi-step reduction path (ti=128 -> 2 reduction steps, exercises the accumulator).
    params = prepare_mlp_params(gate_w, up_w, down_w, ti=128)
    out = jax.block_until_ready(mlp_forward(x, params))
    assert out.shape == (batch, seq, d_model) and out.dtype == x.dtype
    assert jnp.allclose(out, ref, atol=3e-2, rtol=3e-2), "mismatch (multi-step path)"

    # Single-step path (ti == intermediate: no f32 scratch, direct store).
    params1 = prepare_mlp_params(gate_w, up_w, down_w)
    out1 = jax.block_until_ready(mlp_forward(x, params1))
    assert jnp.allclose(out1, ref, atol=3e-2, rtol=3e-2), "mismatch (single-step path)"

    print("KERNEL_OK")
</pallas_src>

<mosaic_0001>
module attributes {stable_mosaic.version = 11 : i64} {
  func.func @_mlp_kernel(%arg0: i32, %arg1: i32, %arg2: memref<8x128xf32, #tpu.memory_space<vmem>>, %arg3: memref<128x256xbf16, #tpu.memory_space<vmem>>, %arg4: memref<128x128xbf16, #tpu.memory_space<vmem>>, %arg5: memref<8x128xf32, #tpu.memory_space<vmem>>, %arg6: memref<8x128xf32, #tpu.memory_space<vmem>>) attributes {dimension_semantics = [#tpu.dimension_semantics<parallel>, #tpu.dimension_semantics<arbitrary>], iteration_bounds = array<i64: 2, 2>, scalar_prefetch = 0 : i64, scratch_operands = 1 : i64, tpu.core_type = #tpu.core_type<tc>, window_params = [{transform_indices = @transform_0, window_bounds = array<i64: 8, 128>}, {transform_indices = @transform_1, window_bounds = array<i64: 128, 256>}, {transform_indices = @transform_2, window_bounds = array<i64: 128, 128>}, {transform_indices = @transform_3, window_bounds = array<i64: 8, 128>}]} {
    %c0 = arith.constant 0 : index
    %c0_0 = arith.constant 0 : index
    %0 = vector.load %arg2[%c0, %c0_0] : memref<8x128xf32, #tpu.memory_space<vmem>>, vector<8x128xf32>
    %1 = arith.truncf %0 : vector<8x128xf32> to vector<8x128xbf16>
    %c0_1 = arith.constant 0 : index
    %c0_2 = arith.constant 0 : index
    %2 = vector.load %arg3[%c0_1, %c0_2] : memref<128x256xbf16, #tpu.memory_space<vmem>>, vector<128x256xbf16>
    %cst = arith.constant dense<0.000000e+00> : vector<8x256xf32>
    %3 = tpu.matmul %1, %2, %cst {dimension_numbers = #tpu.dot_dimension_numbers<[1], [0], [0], [1], [0, 0, 1, 1], [], []>} : vector<8x128xbf16>, vector<128x256xbf16>, vector<8x256xf32> -> vector<8x256xf32>
    %4 = vector.extract_strided_slice %3 {offsets = [0, 0], sizes = [8, 128], strides = [1, 1]} : vector<8x256xf32> to vector<8x128xf32>
    %5 = vector.extract_strided_slice %3 {offsets = [0, 128], sizes = [8, 128], strides = [1, 1]} : vector<8x256xf32> to vector<8x128xf32>
    %cst_3 = arith.constant 5.000000e-01 : f32
    %6 = vector.broadcast %cst_3 : f32 to vector<8x128xf32>
    %7 = arith.mulf %6, %4 : vector<8x128xf32>
    %8 = arith.mulf %4, %4 : vector<8x128xf32>
    %9 = arith.mulf %8, %4 : vector<8x128xf32>
    %cst_4 = arith.constant 4.471500e-02 : f32
    %10 = vector.broadcast %cst_4 : f32 to vector<8x128xf32>
    %11 = arith.mulf %10, %9 : vector<8x128xf32>
    %12 = arith.addf %4, %11 : vector<8x128xf32>
    %cst_5 = arith.constant 0.797884583 : f32
    %13 = vector.broadcast %cst_5 : f32 to vector<8x128xf32>
    %14 = arith.mulf %13, %12 : vector<8x128xf32>
    %15 = math.tanh %14 : vector<8x128xf32>
    %cst_6 = arith.constant 1.000000e+00 : f32
    %16 = vector.broadcast %cst_6 : f32 to vector<8x128xf32>
    %17 = arith.addf %16, %15 : vector<8x128xf32>
    %18 = arith.mulf %7, %17 : vector<8x128xf32>
    %19 = arith.mulf %18, %5 : vector<8x128xf32>
    %20 = arith.truncf %19 : vector<8x128xf32> to vector<8x128xbf16>
    %c0_7 = arith.constant 0 : index
    %c0_8 = arith.constant 0 : index
    %21 = vector.load %arg4[%c0_7, %c0_8] : memref<128x128xbf16, #tpu.memory_space<vmem>>, vector<128x128xbf16>
    %cst_9 = arith.constant dense<0.000000e+00> : vector<8x128xf32>
    %22 = tpu.matmul %20, %21, %cst_9 {dimension_numbers = #tpu.dot_dimension_numbers<[1], [0], [0], [1], [0, 0, 1, 1], [], []>} : vector<8x128xbf16>, vector<128x128xbf16>, vector<8x128xf32> -> vector<8x128xf32>
    %c0_i32 = arith.constant 0 : i32
    %23 = arith.cmpi eq, %arg1, %c0_i32 : i32
    %24 = arith.extui %23 : i1 to i32
    %c0_i32_10 = arith.constant 0 : i32
    %25 = arith.cmpi ne, %24, %c0_i32_10 : i32
    scf.if %25 {
      %c0_15 = arith.constant 0 : index
      %c0_16 = arith.constant 0 : index
      %34 = vector.load %arg6[%c0_15, %c0_16] : memref<8x128xf32, #tpu.memory_space<vmem>>, vector<8x128xf32>
      tpu.vector_store %arg6[%c0_15, %c0_16], %22 {strides = array<i32>} : memref<8x128xf32, #tpu.memory_space<vmem>>, vector<8x128xf32>,
    } else {
    }
    %c0_i32_11 = arith.constant 0 : i32
    %26 = arith.cmpi sgt, %arg1, %c0_i32_11 : i32
    %c1_i32 = arith.constant 1 : i32
    %27 = arith.cmpi slt, %arg1, %c1_i32 : i32
    %28 = arith.andi %26, %27 : i1
    %29 = arith.extui %28 : i1 to i32
    %c0_i32_12 = arith.constant 0 : i32
    %30 = arith.cmpi ne, %29, %c0_i32_12 : i32
    scf.if %30 {
      %c0_15 = arith.constant 0 : index
      %c0_16 = arith.constant 0 : index
      %34 = vector.load %arg6[%c0_15, %c0_16] : memref<8x128xf32, #tpu.memory_space<vmem>>, vector<8x128xf32>
      %35 = arith.addf %34, %22 : vector<8x128xf32>
      %c0_17 = arith.constant 0 : index
      %c0_18 = arith.constant 0 : index
      %36 = vector.load %arg6[%c0_17, %c0_18] : memref<8x128xf32, #tpu.memory_space<vmem>>, vector<8x128xf32>
      tpu.vector_store %arg6[%c0_17, %c0_18], %35 {strides = array<i32>} : memref<8x128xf32, #tpu.memory_space<vmem>>, vector<8x128xf32>,
    } else {
    }
    %c1_i32_13 = arith.constant 1 : i32
    %31 = arith.cmpi eq, %arg1, %c1_i32_13 : i32
    %32 = arith.extui %31 : i1 to i32
    %c0_i32_14 = arith.constant 0 : i32
    %33 = arith.cmpi ne, %32, %c0_i32_14 : i32
    scf.if %33 {
      %c0_15 = arith.constant 0 : index
      %c0_16 = arith.constant 0 : index
      %34 = vector.load %arg6[%c0_15, %c0_16] : memref<8x128xf32, #tpu.memory_space<vmem>>, vector<8x128xf32>
      %35 = arith.addf %34, %22 : vector<8x128xf32>
      %c0_17 = arith.constant 0 : index
      %c0_18 = arith.constant 0 : index
      %36 = vector.load %arg5[%c0_17, %c0_18] : memref<8x128xf32, #tpu.memory_space<vmem>>, vector<8x128xf32>
      tpu.vector_store %arg5[%c0_17, %c0_18], %35 {strides = array<i32>} : memref<8x128xf32, #tpu.memory_space<vmem>>, vector<8x128xf32>,
    } else {
    }
    return
  }
  func.func @transform_0(%arg0: i32, %arg1: i32) -> (i32, i32) {
    %c0_i32 = arith.constant 0 : i32
    %c0_i32_0 = arith.constant 0 : i32
    return %arg0, %c0_i32 : i32, i32
  }
  func.func @transform_1(%arg0: i32, %arg1: i32) -> (i32, i32) {
    %c0_i32 = arith.constant 0 : i32
    %c0_i32_0 = arith.constant 0 : i32
    return %c0_i32, %arg1 : i32, i32
  }
  func.func @transform_2(%arg0: i32, %arg1: i32) -> (i32, i32) {
    %c0_i32 = arith.constant 0 : i32
    %c0_i32_0 = arith.constant 0 : i32
    return %arg1, %c0_i32 : i32, i32
  }
  func.func @transform_3(%arg0: i32, %arg1: i32) -> (i32, i32) {
    %c0_i32 = arith.constant 0 : i32
    %c0_i32_0 = arith.constant 0 : i32
    return %arg0, %c0_i32 : i32, i32
  }
}

</mosaic_0001>

<llo_original>
// kernel: tpu_custom_call.1
$region0: #{tpu_custom_call.1}
  #allocation0 [shape = 'u32[]', space=smem, size = 0x4, offset = 0x4, fixed_abs, tag = 'smem constant byte address 0x4 - core index']
  #allocation1 [shape = 'u32[144,128]{1,0:T(1,128)}', space=vmem, size = 0x12000, scoped, tag = 'internal scratch']
  #allocation2 [shape = 'f32[8,128]{1,0:T(8,128)}', space=vmem, size = 0x1000, scoped, tag = 'scratch operand']
  %s0 = inlined_call_operand.hbm [shape: f32[16,128], index: 0, kind: input, shape index: {}]
  %s1 = inlined_call_operand.hbm [shape: bf16[128,512], index: 1, kind: input, shape index: {}]
  %s2 = inlined_call_operand.hbm [shape: bf16[256,128], index: 2, kind: input, shape index: {}]
  %s3 = inlined_call_operand.hbm [shape: f32[16,128], index: 3, kind: output, shape index: {}]
  %s4 = sld [smem:[#allocation0]]
  $region69: #{tpu_custom_call.1} parent=0
    _
  %s6 = ssub.s32 1, %s4
  %s7 = scalar_select 0, %s6, %s4
  $region1: #{tpu_custom_call.1} parent=0
    #allocation3 [shape = 'u8[8192]{0}', space=vmem, size = 0x2000, scoped, tag = 'input window, operand 0']
    #allocation4 [shape = 's32[2]{0}', space=sflag, size = 0x8, scoped, tag = 'scoped memory for tpu_custom_call.1']
    #allocation5 [shape = 's32[2]{0}', space=sflag, size = 0x8, scoped, tag = 'scoped memory for tpu_custom_call.1']
    #allocation6 [shape = 'u8[131072]{0}', space=vmem, size = 0x20000, scoped, tag = 'input window, operand 1']
    #allocation7 [shape = 's32[2]{0}', space=sflag, size = 0x8, scoped, tag = 'scoped memory for tpu_custom_call.1']
    #allocation8 [shape = 'u8[65536]{0}', space=vmem, size = 0x10000, scoped, tag = 'input window, operand 2']
    #allocation9 [shape = 'u8[8192]{0}', space=vmem, size = 0x2000, scoped, tag = 'output window, operand 0']
    %8 = vsyncpa [#allocation4], 0
    %s9 = scalar_lea.sflag [#allocation4], 1
    %10 = vsyncpa %s9, 0
    %11 = vsyncpa [#allocation7], 0
    %s12 = scalar_lea.sflag [#allocation7], 1
    %13 = vsyncpa %s12, 0
    %14 = vsyncpa [#allocation5], 0
    %s15 = scalar_lea.sflag [#allocation5], 1
    %16 = vsyncpa %s15, 0
    loop: start=0, step=1, limit=6
    $region2: #{tpu_custom_call.1} parent=1 // loop_pre_header
      _
    $region3: #{tpu_custom_call.1} parent=1 // loop_header
      %s18 = sphi 0, %s22
      %p19 = scmp.ge.s32.totalorder %s18, 6
      %s25 = sphi 0, %s37
      %s26 = sphi 0, %s33
      %s27 = sphi 0, %s25
      %s28 = sphi 0, %s26
      %s29 = sphi 0, %s27
      %s30 = sphi 0, %s28
      %s40 = sphi 0, %s42
      %s43 = sphi 0, %s40
      %s44 = sphi 0, %s43
      %s60 = sphi 0, %s44
      %s66 = sphi 0, %s68
      %s69 = sphi 0, %s66
      %s70 = sphi 0, %s69
      %s86 = sphi 0, %s70
      %s92 = sphi 0, %s94
      %s95 = sphi 0, %s92
      %s96 = sphi 0, %s95
      %s112 = sphi 0, %s96
      %s118 = sphi 0, %s120
      %s121 = sphi 0, %s118
      %s122 = sphi 0, %s121
      %s138 = sphi 0, %s122
    $region4: #{tpu_custom_call.1} parent=1 // loop_header_branch
      %21 = sbr.rel (%p19) target = $region8
    $region5: #{tpu_custom_call.1} parent=1 // loop_body
      %s23 = ssub.s32 %s18, 1
      %s24 = ssub.s32 %s18, 2
      %s31 = sadd.s32 1, %s26
      %p32 = scmp.ge.s32.totalorder %s31, 2
      %s33 = scalar_select %p32, 0, %s31
      %s34 = sadd.s32 1, %s25
      %s35 = scalar_select %p32, %s34, %s25
      %p36 = scmp.ge.s32.totalorder %s35, 2
      %s37 = scalar_select %p36, 0, %s35
      %s38 = ssub.s32 %s25, %s37
      %p39 = scmp.eq.s32.totalorder %s38, 0
      %s41 = sadd.s32 %s40, 1
      %s42 = scalar_select %p39, %s40, %s41
      %p45 = pneg %p39
      %p46 = scmp.eq.s32.totalorder %s18, 3
      %p47 = por %p45, %p46
      %p48 = scmp.ne.s32.totalorder %s40, %s43
      %p49 = scmp.eq.s32.totalorder %s18, 0
      %p50 = por %p48, %p49
      %p51 = scmp.ne.s32.totalorder %s40, %s43
      %p52 = scmp.eq.s32.totalorder %s23, 3
      %p53 = por %p51, %p52
      %p54 = scmp.ne.s32.totalorder %s43, %s44
      %p55 = scmp.eq.s32.totalorder %s23, 0
      %p56 = por %p54, %p55
      %p57 = scmp.ne.s32.totalorder %s43, %s44
      %p58 = scmp.eq.s32.totalorder %s24, 3
      %p59 = por %p57, %p58
      %p61 = scmp.ne.s32.totalorder %s44, %s60
      %p62 = scmp.eq.s32.totalorder %s24, 0
      %p63 = por %p61, %p62
      %s64 = ssub.s32 %s26, %s33
      %p65 = scmp.eq.s32.totalorder %s64, 0
      %s67 = sadd.s32 %s66, 1
      %s68 = scalar_select %p65, %s66, %s67
      %p71 = pneg %p65
      %p72 = scmp.eq.s32.totalorder %s18, 3
      %p73 = por %p71, %p72
      %p74 = scmp.ne.s32.totalorder %s66, %s69
      %p75 = scmp.eq.s32.totalorder %s18, 0
      %p76 = por %p74, %p75
      %p77 = scmp.ne.s32.totalorder %s66, %s69
      %p78 = scmp.eq.s32.totalorder %s23, 3
      %p79 = por %p77, %p78
      %p80 = scmp.ne.s32.totalorder %s69, %s70
      %p81 = scmp.eq.s32.totalorder %s23, 0
      %p82 = por %p80, %p81
      %p83 = scmp.ne.s32.totalorder %s69, %s70
      %p84 = scmp.eq.s32.totalorder %s24, 3
      %p85 = por %p83, %p84
      %p87 = scmp.ne.s32.totalorder %s70, %s86
      %p88 = scmp.eq.s32.totalorder %s24, 0
      %p89 = por %p87, %p88
      %s90 = ssub.s32 %s26, %s33
      %p91 = scmp.eq.s32.totalorder %s90, 0
      %s93 = sadd.s32 %s92, 1
      %s94 = scalar_select %p91, %s92, %s93
      %p97 = pneg %p91
      %p98 = scmp.eq.s32.totalorder %s18, 3
      %p99 = por %p97, %p98
      %p100 = scmp.ne.s32.totalorder %s92, %s95
      %p101 = scmp.eq.s32.totalorder %s18, 0
      %p102 = por %p100, %p101
      %p103 = scmp.ne.s32.totalorder %s92, %s95
      %p104 = scmp.eq.s32.totalorder %s23, 3
      %p105 = por %p103, %p104
      %p106 = scmp.ne.s32.totalorder %s95, %s96
      %p107 = scmp.eq.s32.totalorder %s23, 0
      %p108 = por %p106, %p107
      %p109 = scmp.ne.s32.totalorder %s95, %s96
      %p110 = scmp.eq.s32.totalorder %s24, 3
      %p111 = por %p109, %p110
      %p113 = scmp.ne.s32.totalorder %s96, %s112
      %p114 = scmp.eq.s32.totalorder %s24, 0
      %p115 = por %p113, %p114
      %s116 = ssub.s32 %s25, %s37
      %p117 = scmp.eq.s32.totalorder %s116, 0
      %s119 = sadd.s32 %s118, 1
      %s120 = scalar_select %p117, %s118, %s119
      %p123 = pneg %p117
      %p124 = scmp.eq.s32.totalorder %s18, 3
      %p125 = por %p123, %p124
      %p126 = scmp.ne.s32.totalorder %s118, %s121
      %p127 = scmp.eq.s32.totalorder %s18, 0
      %p128 = por %p126, %p127
      %p129 = scmp.ne.s32.totalorder %s118, %s121
      %p130 = scmp.eq.s32.totalorder %s23, 3
      %p131 = por %p129, %p130
      %p132 = scmp.ne.s32.totalorder %s121, %s122
      %p133 = scmp.eq.s32.totalorder %s23, 0
      %p134 = por %p132, %p133
      %p135 = scmp.ne.s32.totalorder %s121, %s122
      %p136 = scmp.eq.s32.totalorder %s24, 3
      %p137 = por %p135, %p136
      %p139 = scmp.ne.s32.totalorder %s122, %s138
      %p140 = scmp.eq.s32.totalorder %s24, 0
      %p141 = por %p139, %p140
      %p142 = scmp.le.s32.totalorder 1, %s18
      %p143 = scmp.lt.s32.totalorder %s18, 5
      %p144 = pnand %p142, %p143
      %p145 = pneg %p144
      // Predicated region
      $region9: #{tpu_custom_call.1} parent=5 // pred_check
        _
      $region10: #{tpu_custom_call.1} parent=5 // pred_check_branch
        %147 = sbr.rel (%p144) target = $region12
      $region11: #{tpu_custom_call.1} parent=5 // pred_region
        %s148 = ssub.s32 %s18, 1
      $region12: #{tpu_custom_call.1} parent=5 // pred_fallthru
        _
      %p149 = scmp.lt.s32.totalorder %s18, 4
      // Predicated region
      $region13: #{tpu_custom_call.1} parent=5 // pred_check
        %p150 = pneg %p149
      $region14: #{tpu_custom_call.1} parent=5 // pred_check_branch
        %152 = sbr.rel (%p150) target = $region16
      $region15: #{tpu_custom_call.1} parent=5 // pred_region
        // Predicated region
        $region17: #{tpu_custom_call.1} parent=15 // pred_check
          %p153 = pneg %p50
        $region18: #{tpu_custom_call.1} parent=15 // pred_check_branch
          %155 = sbr.rel (%p153) target = $region20
        $region19: #{tpu_custom_call.1} parent=15 // pred_region
          %s156 = sand.u32 %s40, 1
          %s157 = scalar_lea.sflag [#allocation4], %s156
          %s158 = sand.u32 %s40, 1
          %s159 = smul.addr %s158, 8
          %s160 = scalar_lea.vmem [#allocation3], %s159
          %s162 = ssub.s32 128, 128
          %163 = vsyncadd %s157, %s162
          %s164 = smul.addr %s25, 128
          %s165 = scalar_lea.hbm %s0, %s164
          %s167 = sshll.u32 %s160, 4
          %s168 = int_to_ptr.vmem [resolvable:$true] %s167
          %170 = dma.hbm_to_vmem [thread:$0]  %s165, 128, %s168, %s157
        $region20: #{tpu_custom_call.1} parent=15 // pred_fallthru
          _
        // Predicated region
        $region21: #{tpu_custom_call.1} parent=15 // pred_check
          %p171 = pneg %p76
        $region22: #{tpu_custom_call.1} parent=15 // pred_check_branch
          %173 = sbr.rel (%p171) target = $region24
        $region23: #{tpu_custom_call.1} parent=15 // pred_region
          %s174 = sand.u32 %s18, 1
          %s175 = scalar_lea.sflag [#allocation7], %s174
          %s176 = sand.u32 %s66, 1
          %s177 = smul.addr %s176, 128
          %s178 = scalar_lea.vmem [#allocation6], %s177
          %s179 = smul.u32 2, %s26
          %s181 = ssub.s32 2048, 2048
          %182 = vsyncadd %s175, %s181
          %s183 = smul.addr %s179, 64
          %s184 = scalar_lea.hbm %s1, %s183
          %s185 = sshll.u32 %s178, 4
          %s186 = int_to_ptr.vmem [resolvable:$true] %s185
          %191 = dma.hbm_to_vmem [thread:$0]  %s184, 2048, %s186, %s175, 256, 128, 8
        $region24: #{tpu_custom_call.1} parent=15 // pred_fallthru
          _
        // Predicated region
        $region25: #{tpu_custom_call.1} parent=15 // pred_check
          %p192 = pneg %p102
        $region26: #{tpu_custom_call.1} parent=15 // pred_check_branch
          %194 = sbr.rel (%p192) target = $region28
        $region27: #{tpu_custom_call.1} parent=15 // pred_region
          %s195 = sand.u32 %s18, 1
          %s196 = scalar_lea.sflag [#allocation7], %s195
          %s197 = sand.u32 %s92, 1
          %s198 = smul.addr %s197, 64
          %s199 = scalar_lea.vmem [#allocation8], %s198
          %s200 = smul.u32 16, %s26
          %s202 = ssub.s32 1024, 1024
          %203 = vsyncadd %s196, %s202
          %s204 = smul.addr %s200, 64
          %s205 = scalar_lea.hbm %s2, %s204
          %s206 = sshll.u32 %s199, 4
          %s207 = int_to_ptr.vmem [resolvable:$true] %s206
          %212 = dma.hbm_to_vmem [thread:$0]  %s205, 1024, %s207, %s196, 64, 64, 4
        $region28: #{tpu_custom_call.1} parent=15 // pred_fallthru
          _
      $region16: #{tpu_custom_call.1} parent=5 // pred_fallthru
        _
      %p213 = scmp.le.s32.totalorder 1, %s18
      %p214 = scmp.lt.s32.totalorder %s18, 5
      %p215 = pnand %p213, %p214
      %p216 = pneg %p215
      // Predicated region
      $region29: #{tpu_custom_call.1} parent=5 // pred_check
        _
      $region30: #{tpu_custom_call.1} parent=5 // pred_check_branch
        %218 = sbr.rel (%p215) target = $region32
      $region31: #{tpu_custom_call.1} parent=5 // pred_region
        %s219 = ssub.s32 %s18, 1
        %s220 = sand.u32 %s43, 1
        %s221 = scalar_lea.sflag [#allocation4], %s220
        %s222 = sand.u32 %s43, 1
        %s223 = smul.addr %s222, 8
        %s224 = scalar_lea.vmem [#allocation3], %s223
        // Predicated region
        $region33: #{tpu_custom_call.1} parent=31 // pred_check
          %p225 = pneg %p56
        $region34: #{tpu_custom_call.1} parent=31 // pred_check_branch
          %227 = sbr.rel (%p225) target = $region36
        $region35: #{tpu_custom_call.1} parent=31 // pred_region
          %228 = dma.done %s221, 128
        $region36: #{tpu_custom_call.1} parent=31 // pred_fallthru
          _
        %s229 = sand.u32 %s23, 1
        %s230 = scalar_lea.sflag [#allocation7], %s229
        %s231 = sand.u32 %s69, 1
        %s232 = smul.addr %s231, 128
        %s233 = scalar_lea.vmem [#allocation6], %s232
        // Predicated region
        $region37: #{tpu_custom_call.1} parent=31 // pred_check
          %p234 = pneg %p82
        $region38: #{tpu_custom_call.1} parent=31 // pred_check_branch
          %236 = sbr.rel (%p234) target = $region40
        $region39: #{tpu_custom_call.1} parent=31 // pred_region
          %237 = dma.done %s230, 2048
        $region40: #{tpu_custom_call.1} parent=31 // pred_fallthru
          _
        %s238 = sand.u32 %s23, 1
        %s239 = scalar_lea.sflag [#allocation7], %s238
        %s240 = sand.u32 %s95, 1
        %s241 = smul.addr %s240, 64
        %s242 = scalar_lea.vmem [#allocation8], %s241
        // Predicated region
        $region41: #{tpu_custom_call.1} parent=31 // pred_check
          %p243 = pneg %p108
        $region42: #{tpu_custom_call.1} parent=31 // pred_check_branch
          %245 = sbr.rel (%p243) target = $region44
        $region43: #{tpu_custom_call.1} parent=31 // pred_region
          %246 = dma.done %s239, 1024
        $region44: #{tpu_custom_call.1} parent=31 // pred_fallthru
          _
        %s247 = sand.u32 %s43, 1
        %s248 = scalar_lea.sflag [#allocation4], %s247
        %s249 = sand.u32 %s43, 1
        %s250 = smul.addr %s249, 8
        %s251 = scalar_lea.vmem [#allocation3], %s250
        %p252 = pneg %p56
        %p253 = pneg %p53
        %s254 = sand.u32 %s23, 1
        %s255 = scalar_lea.sflag [#allocation7], %s254
        %s256 = sand.u32 %s69, 1
        %s257 = smul.addr %s256, 128
        %s258 = scalar_lea.vmem [#allocation6], %s257
        %p259 = pneg %p82
        %p260 = pneg %p79
        %s261 = sand.u32 %s23, 1
        %s262 = scalar_lea.sflag [#allocation7], %s261
        %s263 = sand.u32 %s95, 1
        %s264 = smul.addr %s263, 64
        %s265 = scalar_lea.vmem [#allocation8], %s264
        %p266 = pneg %p108
        %p267 = pneg %p105
        %p268 = pneg %p134
        %p269 = pneg %p131
        %s270 = sand.u32 %s121, 1
        %s271 = scalar_lea.sflag [#allocation5], %s270
        %s272 = sand.u32 %s121, 1
        %s273 = smul.addr %s272, 8
        %s274 = scalar_lea.vmem [#allocation9], %s273
        %s275 = smul.u32 2, %s28
        %s276 = smul.u32 16, %s28
        %v278 = vld [vmem:[%s224] sm:$0xff]
        %v279 = vpack.c.bf16 %v278, %v278
        %v280 = vld [vmem:[%s233] sm:$0xff]
        %v281 = vld [vmem:[%s233 + $0x8] sm:$0xff]
        %v282 = vld [vmem:[%s233 + $0x10] sm:$0xff]
        %v283 = vld [vmem:[%s233 + $0x18] sm:$0xff]
        %v284 = vld [vmem:[%s233 + $0x20] sm:$0xff]
        %v285 = vld [vmem:[%s233 + $0x28] sm:$0xff]
        %v286 = vld [vmem:[%s233 + $0x30] sm:$0xff]
        %v287 = vld [vmem:[%s233 + $0x38] sm:$0xff]
        %v288 = vld [vmem:[%s233 + $0x40] sm:$0xff]
        %v289 = vld [vmem:[%s233 + $0x48] sm:$0xff]
        %v290 = vld [vmem:[%s233 + $0x50] sm:$0xff]
        %v291 = vld [vmem:[%s233 + $0x58] sm:$0xff]
        %v292 = vld [vmem:[%s233 + $0x60] sm:$0xff]
        %v293 = vld [vmem:[%s233 + $0x68] sm:$0xff]
        %v294 = vld [vmem:[%s233 + $0x70] sm:$0xff]
        %v295 = vld [vmem:[%s233 + $0x78] sm:$0xff]
        %v312 = vunpack.c.l.b16 %v280
        %v313 = vunpack.c.h.b16 %v280
        %v314 = vunpack.c.l.b16 %v281
        %v315 = vunpack.c.h.b16 %v281
        %v316 = vunpack.c.l.b16 %v282
        %v317 = vunpack.c.h.b16 %v282
        %v318 = vunpack.c.l.b16 %v283
        %v319 = vunpack.c.h.b16 %v283
        %v320 = vunpack.c.l.b16 %v284
        %v321 = vunpack.c.h.b16 %v284
        %v322 = vunpack.c.l.b16 %v285
        %v323 = vunpack.c.h.b16 %v285
        %v324 = vunpack.c.l.b16 %v286
        %v325 = vunpack.c.h.b16 %v286
        %v326 = vunpack.c.l.b16 %v287
        %v327 = vunpack.c.h.b16 %v287
        %v328 = vunpack.c.l.b16 %v288
        %v329 = vunpack.c.h.b16 %v288
        %v330 = vunpack.c.l.b16 %v289
        %v331 = vunpack.c.h.b16 %v289
        %v332 = vunpack.c.l.b16 %v290
        %v333 = vunpack.c.h.b16 %v290
        %v334 = vunpack.c.l.b16 %v291
        %v335 = vunpack.c.h.b16 %v291
        %v336 = vunpack.c.l.b16 %v292
        %v337 = vunpack.c.h.b16 %v292
        %v338 = vunpack.c.l.b16 %v293
        %v339 = vunpack.c.h.b16 %v293
        %v340 = vunpack.c.l.b16 %v294
        %v341 = vunpack.c.h.b16 %v294
        %v342 = vunpack.c.l.b16 %v295
        %v343 = vunpack.c.h.b16 %v295
        %v344 = vpack.c.b16 %v314, %v312
        %v345 = vpack.c.b16 %v315, %v313
        %v346 = vpack.c.b16 %v318, %v316
        %v347 = vpack.c.b16 %v319, %v317
        %v348 = vpack.c.b16 %v322, %v320
        %v349 = vpack.c.b16 %v323, %v321
        %v350 = vpack.c.b16 %v326, %v324
        %v351 = vpack.c.b16 %v327, %v325
        %v352 = vpack.c.b16 %v330, %v328
        %v353 = vpack.c.b16 %v331, %v329
        %v354 = vpack.c.b16 %v334, %v332
        %v355 = vpack.c.b16 %v335, %v333
        %v356 = vpack.c.b16 %v338, %v336
        %v357 = vpack.c.b16 %v339, %v337
        %v358 = vpack.c.b16 %v342, %v340
        %v359 = vpack.c.b16 %v343, %v341
        %376 = vmatprep.subr.bf16.mxu0 %v345
        %377 = vmatpush1.bf16.msra.mxu0 %v344
        %378 = vmatprep.subr.bf16.mxu0 %v347
        %379 = vmatpush1.bf16.msra.mxu0 %v346
        %380 = vmatprep.subr.bf16.mxu0 %v349
        %381 = vmatpush1.bf16.msra.mxu0 %v348
        %382 = vmatprep.subr.bf16.mxu0 %v351
        %383 = vmatpush1.bf16.msra.mxu0 %v350
        %384 = vmatprep.subr.bf16.mxu0 %v353
        %385 = vmatpush1.bf16.msra.mxu0 %v352
        %386 = vmatprep.subr.bf16.mxu0 %v355
        %387 = vmatpush1.bf16.msra.mxu0 %v354
        %388 = vmatprep.subr.bf16.mxu0 %v357
        %389 = vmatpush1.bf16.msra.mxu0 %v356
        %390 = vmatprep.subr.bf16.mxu0 %v359
        %391 = vmatpush1.bf16.msra.mxu0 %v358
        %392 = vmatprep.subr.bf16.mxu0 0
        %393 = vmatpush1.bf16.msra.mxu0 0
        %394 = vmatprep.subr.bf16.mxu0 0
        %395 = vmatpush1.bf16.msra.mxu0 0
        %396 = vmatprep.subr.bf16.mxu0 0
        %397 = vmatpush1.bf16.msra.mxu0 0
        %398 = vmatprep.subr.bf16.mxu0 0
        %399 = vmatpush1.bf16.msra.mxu0 0
        %400 = vmatprep.subr.bf16.mxu0 0
        %401 = vmatpush1.bf16.msra.mxu0 0
        %402 = vmatprep.subr.bf16.mxu0 0
        %403 = vmatpush1.bf16.msra.mxu0 0
        %404 = vmatprep.subr.bf16.mxu0 0
        %405 = vmatpush1.bf16.msra.mxu0 0
        %406 = vmatprep.subr.bf16.mxu0 0
        %407 = vmatpush1.bf16.msra.mxu0 0
        %408 = vmatprep.mubr.bf16.mxu0 0
        %409 = vmatmul.mubr.bf16.gmra.mrb[0].mxu0 %v279
        %v410 = vpop.f32.mrb[0].mxu0
        %v411 = vadd.f32 0.0, %v410
        %v412 = vpop.f32.mrb[0].mxu0
        %v413 = vadd.f32 0.0, %v412
        %v414 = vpop.f32.mrb[0].mxu0
        %v415 = vpop.f32.mrb[0].mxu0
        %416 = vdwg.mxu0
        %v417 = vmul.f32 %v411, 0.5
        %v418 = vmul.f32 %v411, %v411
        %v419 = vmul.f32 %v418, %v411
        %v420 = vmul.f32 %v419, 0.044715
        %v421 = vadd.f32 %v411, %v420
        %v422 = vmul.f32 %v421, 0.7978846
        %v423 = vtanh.pop %v422
        %v424 = vadd.f32 %v423, 1.0
        %v425 = vmul.f32 %v417, %v424
        %v426 = vmul.f32 %v425, %v413
        %v427 = vpack.c.bf16 %v426, %v426
        %v428 = vld [vmem:[%s242] sm:$0xf]
        %v429 = vld [vmem:[%s242 + $0x4] sm:$0xf]
        %v430 = vld [vmem:[%s242 + $0x8] sm:$0xf]
        %v431 = vld [vmem:[%s242 + $0xc] sm:$0xf]
        %v432 = vld [vmem:[%s242 + $0x10] sm:$0xf]
        %v433 = vld [vmem:[%s242 + $0x14] sm:$0xf]
        %v434 = vld [vmem:[%s242 + $0x18] sm:$0xf]
        %v435 = vld [vmem:[%s242 + $0x1c] sm:$0xf]
        %v436 = vld [vmem:[%s242 + $0x20] sm:$0xf]
        %v437 = vld [vmem:[%s242 + $0x24] sm:$0xf]
        %v438 = vld [vmem:[%s242 + $0x28] sm:$0xf]
        %v439 = vld [vmem:[%s242 + $0x2c] sm:$0xf]
        %v440 = vld [vmem:[%s242 + $0x30] sm:$0xf]
        %v441 = vld [vmem:[%s242 + $0x34] sm:$0xf]
        %v442 = vld [vmem:[%s242 + $0x38] sm:$0xf]
        %v443 = vld [vmem:[%s242 + $0x3c] sm:$0xf]
        %v460 = vunpack.c.l.b16 %v428
        %v461 = vunpack.c.l.b16 %v429
        %v462 = vunpack.c.l.b16 %v430
        %v463 = vunpack.c.l.b16 %v431
        %v464 = vunpack.c.l.b16 %v432
        %v465 = vunpack.c.l.b16 %v433
        %v466 = vunpack.c.l.b16 %v434
        %v467 = vunpack.c.l.b16 %v435
        %v468 = vunpack.c.l.b16 %v436
        %v469 = vunpack.c.l.b16 %v437
        %v470 = vunpack.c.l.b16 %v438
        %v471 = vunpack.c.l.b16 %v439
        %v472 = vunpack.c.l.b16 %v440
        %v473 = vunpack.c.l.b16 %v441
        %v474 = vunpack.c.l.b16 %v442
        %v475 = vunpack.c.l.b16 %v443
        %v476 = vpack.c.b16 %v461, %v460
        %v477 = vpack.c.b16 %v463, %v462
        %v478 = vpack.c.b16 %v465, %v464
        %v479 = vpack.c.b16 %v467, %v466
        %v480 = vpack.c.b16 %v469, %v468
        %v481 = vpack.c.b16 %v471, %v470
        %v482 = vpack.c.b16 %v473, %v472
        %v483 = vpack.c.b16 %v475, %v474
        %492 = vmatprep.subr.bf16.mxu0 0
        %493 = vmatpush1.bf16.msra.mxu0 %v476
        %494 = vmatprep.subr.bf16.mxu0 0
        %495 = vmatpush1.bf16.msra.mxu0 %v477
        %496 = vmatprep.subr.bf16.mxu0 0
        %497 = vmatpush1.bf16.msra.mxu0 %v478
        %498 = vmatprep.subr.bf16.mxu0 0
        %499 = vmatpush1.bf16.msra.mxu0 %v479
        %500 = vmatprep.subr.bf16.mxu0 0
        %501 = vmatpush1.bf16.msra.mxu0 %v480
        %502 = vmatprep.subr.bf16.mxu0 0
        %503 = vmatpush1.bf16.msra.mxu0 %v481
        %504 = vmatprep.subr.bf16.mxu0 0
        %505 = vmatpush1.bf16.msra.mxu0 %v482
        %506 = vmatprep.subr.bf16.mxu0 0
        %507 = vmatpush1.bf16.msra.mxu0 %v483
        %508 = vmatprep.subr.bf16.mxu0 0
        %509 = vmatpush1.bf16.msra.mxu0 0
        %510 = vmatprep.subr.bf16.mxu0 0
        %511 = vmatpush1.bf16.msra.mxu0 0
        %512 = vmatprep.subr.bf16.mxu0 0
        %513 = vmatpush1.bf16.msra.mxu0 0
        %514 = vmatprep.subr.bf16.mxu0 0
        %515 = vmatpush1.bf16.msra.mxu0 0
        %516 = vmatprep.subr.bf16.mxu0 0
        %517 = vmatpush1.bf16.msra.mxu0 0
        %518 = vmatprep.subr.bf16.mxu0 0
        %519 = vmatpush1.bf16.msra.mxu0 0
        %520 = vmatprep.subr.bf16.mxu0 0
        %521 = vmatpush1.bf16.msra.mxu0 0
        %522 = vmatprep.subr.bf16.mxu0 0
        %523 = vmatpush1.bf16.msra.mxu0 0
        %524 = vmatprep.mubr.bf16.mxu0 0
        %525 = vmatmul.mubr.bf16.gmra.mrb[0].mxu0 %v427
        %v526 = vpop.f32.mrb[0].mxu0
        %v527 = vadd.f32 0.0, %v526
        %v528 = vpop.f32.mrb[0].mxu0
        %v529 = vpop.f32.mrb[0].mxu0
        %v530 = vpop.f32.mrb[0].mxu0
        %531 = vdwg.mxu0
        %p532 = scmp.eq.s32.totalorder %s28, 0
        // Predicated region
        $region45: #{tpu_custom_call.1} parent=31 // pred_check
          %p533 = pneg %p532
        $region46: #{tpu_custom_call.1} parent=31 // pred_check_branch
          %535 = sbr.rel (%p533) target = $region48
        $region47: #{tpu_custom_call.1} parent=31 // pred_region
          %536 = vst [vmem:[#allocation2] sm:$0xff] %v527
        $region48: #{tpu_custom_call.1} parent=31 // pred_fallthru
          _
        %p537 = scmp.gt.s32.totalorder %s28, 0
        %p538 = scmp.lt.s32.totalorder %s28, 1
        %p539 = pnand %p537, %p538
        %p540 = pneg %p539
        // Predicated region
        $region49: #{tpu_custom_call.1} parent=31 // pred_check
          _
        $region50: #{tpu_custom_call.1} parent=31 // pred_check_branch
          %542 = sbr.rel (%p539) target = $region52
        $region51: #{tpu_custom_call.1} parent=31 // pred_region
          %v543 = vld [vmem:[#allocation2] sm:$0xff]
          %v544 = vadd.f32 %v543, %v527
          %545 = vst [vmem:[#allocation2] sm:$0xff] %v544
        $region52: #{tpu_custom_call.1} parent=31 // pred_fallthru
          _
        %p546 = scmp.eq.s32.totalorder %s28, 1
        // Predicated region
        $region53: #{tpu_custom_call.1} parent=31 // pred_check
          %p547 = pneg %p546
        $region54: #{tpu_custom_call.1} parent=31 // pred_check_branch
          %549 = sbr.rel (%p547) target = $region56
        $region55: #{tpu_custom_call.1} parent=31 // pred_region
          %v550 = vld [vmem:[#allocation2] sm:$0xff]
          %v551 = vadd.f32 %v550, %v527
          %552 = vst [vmem:[%s274] sm:$0xff] %v551
        $region56: #{tpu_custom_call.1} parent=31 // pred_fallthru
          _
        %s553 = sand.u32 %s121, 1
        %s554 = scalar_lea.sflag [#allocation5], %s553
        %s555 = sand.u32 %s121, 1
        %s556 = smul.addr %s555, 8
        %s557 = scalar_lea.vmem [#allocation9], %s556
        // Predicated region
        $region57: #{tpu_custom_call.1} parent=31 // pred_check
          %p558 = pneg %p131
        $region58: #{tpu_custom_call.1} parent=31 // pred_check_branch
          %560 = sbr.rel (%p558) target = $region60
        $region59: #{tpu_custom_call.1} parent=31 // pred_region
          %s562 = ssub.s32 128, 128
          %563 = vsyncadd %s554, %s562
          %s564 = smul.addr %s27, 128
          %s565 = scalar_lea.hbm %s3, %s564
          %s567 = sshll.u32 %s557, 4
          %s568 = int_to_ptr.vmem [resolvable:$true] %s567
          %570 = dma.vmem_to_hbm [thread:$0]  %s568, 128, %s565, %s554
        $region60: #{tpu_custom_call.1} parent=31 // pred_fallthru
          _
      $region32: #{tpu_custom_call.1} parent=5 // pred_fallthru
        _
      %p571 = scmp.le.s32.totalorder 2, %s18
      // Predicated region
      $region61: #{tpu_custom_call.1} parent=5 // pred_check
        %p572 = pneg %p571
      $region62: #{tpu_custom_call.1} parent=5 // pred_check_branch
        %574 = sbr.rel (%p572) target = $region64
      $region63: #{tpu_custom_call.1} parent=5 // pred_region
        %s575 = ssub.s32 %s18, 2
        // Predicated region
        $region65: #{tpu_custom_call.1} parent=63 // pred_check
          %p576 = pneg %p137
        $region66: #{tpu_custom_call.1} parent=63 // pred_check_branch
          %578 = sbr.rel (%p576) target = $region68
        $region67: #{tpu_custom_call.1} parent=63 // pred_region
          %s579 = sand.u32 %s122, 1
          %s580 = scalar_lea.sflag [#allocation5], %s579
          %s581 = sand.u32 %s122, 1
          %s582 = smul.addr %s581, 8
          %s583 = scalar_lea.vmem [#allocation9], %s582
          %584 = dma.done %s580, 128
        $region68: #{tpu_custom_call.1} parent=63 // pred_fallthru
          _
      $region64: #{tpu_custom_call.1} parent=5 // pred_fallthru
        _
    $region6: #{tpu_custom_call.1} parent=1 // loop_footer
      %s22 = sadd.s32 1, %s18
    $region7: #{tpu_custom_call.1} parent=1 // loop_footer_branch
      %17 = sbr.rel target = $region3
    $region8: #{tpu_custom_call.1} parent=1 // loop_exit
      _
    %585 = vsyncpa [#allocation4], 1
    %s586 = scalar_lea.sflag [#allocation4], 1
    %587 = vsyncpa %s586, 1
    %588 = vsyncpa [#allocation7], 1
    %s589 = scalar_lea.sflag [#allocation7], 1
    %590 = vsyncpa %s589, 1
    %591 = vsyncpa [#allocation5], 1
    %s592 = scalar_lea.sflag [#allocation5], 1
    %593 = vsyncpa %s592, 1

</llo_original>
